<compile_context>
chip_gen: v5e
topology: v5e:2x2
jax: 0.10.0
libtpu: 0.0.40
codegen_flags: <defaults>
</compile_context>

<pallas_src>
import jax
import jax.numpy as jnp
from jax import lax
from jax.experimental import pallas as pl
from jax.experimental.pallas import tpu as pltpu


def _round_up(a, b):
    return ((a + b - 1) // b) * b


def _cdiv(a, b):
    return (a + b - 1) // b


def _vmem_budget_bytes():
    """Per-generation scoped-VMEM limit: ~75% of physical, capped at 96 MiB.
    v5e/v6e (128 MiB) -> 96 MiB; v7x (64 MiB per TensorCore) -> 48 MiB."""
    cap = None
    try:
        cap = getattr(pltpu.get_tpu_info(), "vmem_capacity_bytes", None)
    except Exception:
        cap = None
    if not cap:
        cap = 64 * 1024 * 1024  # conservative fallback (v7x per-TC VMEM)
    return int(min((cap * 3) // 4, 96 * 1024 * 1024))


def _select_tiles(m, d_in, d_out, x_it, w_it, out_it, budget, tm, tn, tk):
    """Pick (tm, tn, tk) sized against the per-generation VMEM budget."""
    kp = _round_up(d_in, 128)  # lane-aligned reduction extent

    tm = max(16, min(tm, _round_up(m, 16)))        # bf16 sublane packing
    tn = max(128, min(tn, _round_up(d_out, 256)))  # full MXU width on v6e/v7x

    def vmem_bytes(tm_, tn_, tk_):
        b = 2 * tm_ * tk_ * x_it       # x blocks (double buffered)
        b += 2 * tk_ * tn_ * w_it      # w blocks
        b += 2 * tn_ * 4               # bias blocks
        b += 2 * tm_ * tn_ * out_it    # out blocks
        if tk_ < kp:                   # multi-K -> f32 accumulator scratch
            b += tm_ * tn_ * 4
        return b

    limit = int(budget * 0.8)

    if tk is None:
        # Prefer collapsing the reduction: single K step -> no scratch, no
        # per-k read-modify-write; with grid_n == 1 the weight block index is
        # constant, so it is DMA'd once and stays resident in VMEM.
        tk = kp if vmem_bytes(tm, tn, kp) <= limit else min(1024, kp)
    else:
        tk = max(128, min(_round_up(tk, 128), kp))

    # Shrink until the working set fits the budget.
    while vmem_bytes(tm, tn, tk) > limit:
        if tk > 512:
            tk = max(512, _round_up(tk // 2, 128))
        elif tn > 256:
            tn = max(256, _round_up(tn // 2, 256))
        elif tm > 64:
            tm = max(64, _round_up(tm // 2, 16))
        else:
            break

    # v7x shards the "parallel" grid axes over its 2 TensorCores: guarantee
    # >= 2 output blocks whenever the problem is big enough to split.
    if _cdiv(m, tm) * _cdiv(d_out, tn) == 1:
        if m > 16 and tm >= 32:
            tm = max(16, _round_up(_cdiv(m, 2), 16))
        elif d_out > 256 and tn >= 512:
            tn = max(256, _round_up(_cdiv(d_out, 2), 256))

    return tm, tn, tk


def _make_single_step_kernel(d_in, tk, compute_dtype):
    """Whole reduction in one grid step: no accumulator scratch, no RMW."""
    tail = d_in < tk  # K block is lane-padded past the logical reduction

    def kernel(x_ref, w_ref, b_ref, o_ref):
        x = x_ref[...]
        w = w_ref[...]
        if tail:
            # Zero the garbage K tail on BOTH operands so no padding garbage
            # (possibly NaN) can leak into valid output columns.
            col = lax.broadcasted_iota(jnp.int32, (1, tk), 1) < d_in
            row = lax.broadcasted_iota(jnp.int32, (tk, 1), 0) < d_in
            x = jnp.where(col, x, 0)
            w = jnp.where(row, w, 0)
        acc = jnp.dot(x.astype(compute_dtype), w,
                      preferred_element_type=jnp.float32)
        o_ref[...] = (acc + b_ref[...]).astype(o_ref.dtype)

    return kernel


def _make_multi_step_kernel(d_in, tk, compute_dtype):
    """K-innermost grid with an f32 VMEM accumulator; bias folded into init."""
    has_tail = (d_in % tk) != 0

    def kernel(x_ref, w_ref, b_ref, o_ref, acc_ref):
        k = pl.program_id(2)

        @pl.when(k == 0)
        def _():
            # Bias folded into the accumulator init (the tile write at k==0
            # was needed anyway); the epilogue becomes a pure cast + store.
            acc_ref[...] = jnp.broadcast_to(b_ref[...], acc_ref.shape)

        x = x_ref[...]
        w = w_ref[...]
        if has_tail:
            rem = d_in - k * tk  # >= tk on all but the last K step
            col = lax.broadcasted_iota(jnp.int32, (1, tk), 1) < rem
            row = lax.broadcasted_iota(jnp.int32, (tk, 1), 0) < rem
            x = jnp.where(col, x, 0)
            w = jnp.where(row, w, 0)
        acc_ref[...] += jnp.dot(x.astype(compute_dtype), w,
                                preferred_element_type=jnp.float32)

        @pl.when(k == pl.num_programs(2) - 1)
        def _():
            o_ref[...] = acc_ref[...].astype(o_ref.dtype)

    return kernel


def prepare_ffn_params(w, b, compute_dtype=jnp.bfloat16):
    """One-time parameter prep, hoisted out of the per-call hot path:
    bf16 weight (full-rate MXU feed) and f32 row-vector bias."""
    return w.astype(compute_dtype), b.reshape(1, -1).astype(jnp.float32)


def feedforward_pallas(x, w_c, b_c, *, tm=512, tn=512, tk=None,
                       out_dtype=None, input_buffering=None):
    """FeedFowardBase.forward with _forward(x) = x @ W + b.

    x:   (..., d_in), any float dtype (cast to bf16 per-tile in-kernel)
    w_c: (d_in, d_out) bf16, b_c: (1, d_out) f32 (from prepare_ffn_params)
    """
    leading = x.shape[:-1]
    d_in = x.shape[-1]
    d_out = w_c.shape[-1]
    out_dtype = x.dtype if out_dtype is None else out_dtype

    x2d = x.reshape(-1, d_in)  # metadata-only reshape; no pad, no copy
    m = x2d.shape[0]

    vmem_limit = _vmem_budget_bytes()
    tm, tn, tk = _select_tiles(
        m, d_in, d_out,
        x_it=x2d.dtype.itemsize, w_it=w_c.dtype.itemsize,
        out_it=jnp.dtype(out_dtype).itemsize,
        budget=vmem_limit, tm=tm, tn=tn, tk=tk)

    grid_m = _cdiv(m, tm)
    grid_n = _cdiv(d_out, tn)
    grid_k = _cdiv(d_in, tk)

    def in_spec(shape, index_map):
        if input_buffering and input_buffering != 2:
            # Deeper input buffering: hides HBM latency if DMA is exposed.
            return pl.BlockSpec(shape, index_map,
                                pipeline_mode=pl.Buffered(input_buffering))
        return pl.BlockSpec(shape, index_map)

    if grid_k == 1:
        kernel = _make_single_step_kernel(d_in, tk, w_c.dtype)
        grid = (grid_m, grid_n)
        in_specs = [
            in_spec((tm, tk), lambda i, j: (i, 0)),
            in_spec((tk, tn), lambda i, j: (0, j)),  # grid_n==1 -> resident
            pl.BlockSpec((1, tn), lambda i, j: (0, j)),
        ]
        out_specs = pl.BlockSpec((tm, tn), lambda i, j: (i, j))
        scratch_shapes = []
        dim_sem = ("parallel", "parallel")
    else:
        kernel = _make_multi_step_kernel(d_in, tk, w_c.dtype)
        grid = (grid_m, grid_n, grid_k)
        in_specs = [
            in_spec((tm, tk), lambda i, j, k: (i, k)),
            in_spec((tk, tn), lambda i, j, k: (k, j)),
            pl.BlockSpec((1, tn), lambda i, j, k: (0, j)),
        ]
        out_specs = pl.BlockSpec((tm, tn), lambda i, j, k: (i, j))
        scratch_shapes = [pltpu.VMEM((tm, tn), jnp.float32)]
        dim_sem = ("parallel", "parallel", "arbitrary")

    cost = pl.CostEstimate(
        flops=2 * m * d_out * d_in,
        transcendentals=0,
        bytes_accessed=(
            grid_n * m * d_in * x2d.dtype.itemsize        # x re-read per N col
            + grid_m * d_in * d_out * w_c.dtype.itemsize  # w re-read per M row
            + grid_m * d_out * 4                          # bias
            + m * d_out * jnp.dtype(out_dtype).itemsize   # output writeback
        ),
    )

    out2d = pl.pallas_call(
        kernel,
        out_shape=jax.ShapeDtypeStruct((m, d_out), out_dtype),
        grid_spec=pltpu.PrefetchScalarGridSpec(
            num_scalar_prefetch=0,
            grid=grid,
            in_specs=in_specs,
            out_specs=out_specs,
            scratch_shapes=scratch_shapes,
        ),
        compiler_params=pltpu.CompilerParams(
            dimension_semantics=dim_sem,
            vmem_limit_bytes=vmem_limit,
        ),
        cost_estimate=cost,
    )(x2d, w_c, b_c)

    return out2d.reshape(*leading, d_out)


class FeedForward:
    """Pallas realization of FeedFowardBase (``_forward`` = linear + bias)."""

    def __init__(self, w, b):
        self.output_dim = w.shape[-1]
        self.w, self.b = prepare_ffn_params(w, b)

    def __call__(self, x, **kwargs):
        return feedforward_pallas(x, self.w, self.b, **kwargs)


if __name__ == "__main__":
    key = jax.random.PRNGKey(0)
    ks = jax.random.split(key, 6)

    # --- Small shapes implied by the module: x is (..., in_features). ---
    batch, seq, d_in, d_out = 2, 8, 32, 16
    x = jax.random.normal(ks[0], (batch, seq, d_in), dtype=jnp.float32)
    w = jax.random.normal(ks[1], (d_in, d_out), dtype=jnp.float32) * 0.02
    b = jax.random.normal(ks[2], (d_out,), dtype=jnp.float32) * 0.01

    ffn = FeedForward(w, b)
    out = jax.block_until_ready(ffn(x))
    assert out.shape == (batch, seq, d_out)

    ref = (
        jnp.dot(x.reshape(-1, d_in).astype(jnp.bfloat16),
                w.astype(jnp.bfloat16),
                preferred_element_type=jnp.float32) + b
    ).reshape(batch, seq, d_out)
    assert jnp.allclose(out, ref, atol=2e-3, rtol=2e-3)

    # --- Multi-tile path: ragged M / N, K accumulation with in-kernel K-tail
    #     masking, parallel M/N grid axes, f32 accumulator + bias-fold init. ---
    m2, d_in2, d_out2 = 300, 600, 384
    x2 = jax.random.normal(ks[3], (m2, d_in2), dtype=jnp.float32)
    w2 = jax.random.normal(ks[4], (d_in2, d_out2), dtype=jnp.float32) * 0.02
    b2 = jax.random.normal(ks[5], (d_out2,), dtype=jnp.float32) * 0.01

    w2c, b2c = prepare_ffn_params(w2, b2)
    out2 = jax.block_until_ready(
        feedforward_pallas(x2, w2c, b2c, tm=128, tn=256, tk=256))
    ref2 = jnp.dot(x2.astype(jnp.bfloat16), w2.astype(jnp.bfloat16),
                   preferred_element_type=jnp.float32) + b2
    assert out2.shape == (m2, d_out2)
    assert jnp.allclose(out2, ref2, atol=3e-3, rtol=3e-3)

    print("KERNEL_OK")
</pallas_src>

<mosaic_0001>
module attributes {stable_mosaic.version = 11 : i64} {
  func.func @kernel(%arg0: i32, %arg1: i32, %arg2: memref<16x128xf32, #tpu.memory_space<vmem>>, %arg3: memref<128x256xbf16, #tpu.memory_space<vmem>>, %arg4: memref<1x256xf32, #tpu.memory_space<vmem>>, %arg5: memref<16x256xf32, #tpu.memory_space<vmem>>) attributes {dimension_semantics = [#tpu.dimension_semantics<parallel>, #tpu.dimension_semantics<parallel>], iteration_bounds = array<i64: 1, 1>, scalar_prefetch = 0 : i64, scratch_operands = 0 : i64, tpu.core_type = #tpu.core_type<tc>, window_params = [{transform_indices = @transform_0, window_bounds = array<i64: 16, 128>}, {transform_indices = @transform_1, window_bounds = array<i64: 128, 256>}, {transform_indices = @transform_2, window_bounds = array<i64: 1, 256>}, {transform_indices = @transform_3, window_bounds = array<i64: 16, 256>}]} {
    %c0 = arith.constant 0 : index
    %c0_0 = arith.constant 0 : index
    %0 = vector.load %arg2[%c0, %c0_0] : memref<16x128xf32, #tpu.memory_space<vmem>>, vector<16x128xf32>
    %c0_1 = arith.constant 0 : index
    %c0_2 = arith.constant 0 : index
    %1 = vector.load %arg3[%c0_1, %c0_2] : memref<128x256xbf16, #tpu.memory_space<vmem>>, vector<128x256xbf16>
    %2 = tpu.iota {dimensions = array<i32: 1>} : vector<1x128xi32>
    %c32_i32 = arith.constant 32 : i32
    %3 = vector.broadcast %c32_i32 : i32 to vector<1x128xi32>
    %4 = arith.cmpi slt, %2, %3 : vector<1x128xi32>
    %5 = tpu.iota {dimensions = array<i32: 0>} : vector<128x1xi32>
    %c32_i32_3 = arith.constant 32 : i32
    %6 = vector.broadcast %c32_i32_3 : i32 to vector<128x1xi32>
    %7 = arith.cmpi slt, %5, %6 : vector<128x1xi32>
    %c0_i32 = arith.constant 0 : i32
    %8 = arith.sitofp %c0_i32 : i32 to f32
    %9 = vector.shape_cast %4 : vector<1x128xi1> to vector<1x128xi1>
    %10 = vector.broadcast %9 : vector<1x128xi1> to vector<16x128xi1>
    %11 = vector.broadcast %8 : f32 to vector<16x128xf32>
    %12 = arith.select %10, %0, %11 : vector<16x128xi1>, vector<16x128xf32>
    %c0_i32_4 = arith.constant 0 : i32
    %13 = arith.sitofp %c0_i32_4 : i32 to bf16
    %14 = vector.shape_cast %7 : vector<128x1xi1> to vector<128x1xi1>
    %15 = vector.broadcast %14 : vector<128x1xi1> to vector<128x256xi1>
    %16 = vector.broadcast %13 : bf16 to vector<128x256xbf16>
    %17 = arith.select %15, %1, %16 : vector<128x256xi1>, vector<128x256xbf16>
    %18 = arith.truncf %12 : vector<16x128xf32> to vector<16x128xbf16>
    %cst = arith.constant dense<0.000000e+00> : vector<16x256xf32>
    %19 = tpu.matmul %18, %17, %cst {dimension_numbers = #tpu.dot_dimension_numbers<[1], [0], [0], [1], [0, 0, 1, 1], [], []>} : vector<16x128xbf16>, vector<128x256xbf16>, vector<16x256xf32> -> vector<16x256xf32>
    %c0_5 = arith.constant 0 : index
    %c0_6 = arith.constant 0 : index
    %20 = vector.load %arg4[%c0_5, %c0_6] : memref<1x256xf32, #tpu.memory_space<vmem>>, vector<1x256xf32>
    %21 = vector.broadcast %20 : vector<1x256xf32> to vector<16x256xf32>
    %22 = arith.addf %19, %21 : vector<16x256xf32>
    %c0_7 = arith.constant 0 : index
    %c0_8 = arith.constant 0 : index
    %23 = vector.load %arg5[%c0_7, %c0_8] : memref<16x256xf32, #tpu.memory_space<vmem>>, vector<16x256xf32>
    tpu.vector_store %arg5[%c0_7, %c0_8], %22 {strides = array<i32>} : memref<16x256xf32, #tpu.memory_space<vmem>>, vector<16x256xf32>,
    return
  }
  func.func @transform_0(%arg0: i32, %arg1: i32) -> (i32, i32) {
    %c0_i32 = arith.constant 0 : i32
    %c0_i32_0 = arith.constant 0 : i32
    return %arg0, %c0_i32 : i32, i32
  }
  func.func @transform_1(%arg0: i32, %arg1: i32) -> (i32, i32) {
    %c0_i32 = arith.constant 0 : i32
    %c0_i32_0 = arith.constant 0 : i32
    return %c0_i32, %arg1 : i32, i32
  }
  func.func @transform_2(%arg0: i32, %arg1: i32) -> (i32, i32) {
    %c0_i32 = arith.constant 0 : i32
    %c0_i32_0 = arith.constant 0 : i32
    return %c0_i32, %arg1 : i32, i32
  }
  func.func @transform_3(%arg0: i32, %arg1: i32) -> (i32, i32) {
    %c0_i32 = arith.constant 0 : i32
    return %arg0, %arg1 : i32, i32
  }
}

</mosaic_0001>

<llo_original>
// kernel: tpu_custom_call.1
$region0: #{tpu_custom_call.1}
  #allocation0 [shape = 'u32[]', space=smem, size = 0x4, offset = 0x4, fixed_abs, tag = 'smem constant byte address 0x4 - core index']
  #allocation1 [shape = 'u32[72,128]{1,0:T(1,128)}', space=vmem, size = 0x9000, scoped, tag = 'internal scratch']
  %s0 = inlined_call_operand.vmem [shape: f32[16,32], index: 0, kind: input, shape index: {}]
  %s1 = inlined_call_operand.vmem [shape: bf16[32,16], index: 1, kind: input, shape index: {}]
  %s2 = inlined_call_operand.vmem [shape: f32[1,16], index: 2, kind: input, shape index: {}]
  %s3 = inlined_call_operand.hbm [shape: f32[16,16], index: 3, kind: output, shape index: {}]
  %s4 = sld [smem:[#allocation0]]
  $region63: #{tpu_custom_call.1} parent=0
    _
  %s6 = ssub.s32 1, %s4
  %s7 = scalar_select 0, %s6, %s4
  $region1: #{tpu_custom_call.1} parent=0
    #allocation2 [shape = 'u8[65536]{0}', space=vmem, size = 0x10000, scoped, tag = 'input window, operand 1, single buffered']
    #allocation3 [shape = 'u8[16384]{0}', space=vmem, size = 0x4000, scoped, tag = 'output window, operand 0, single buffered']
    #allocation4 [shape = 's32[1]{0}', space=sflag, size = 0x4, scoped, tag = 'scoped memory for tpu_custom_call.1']
    %8 = vsyncpa [#allocation4], 0
    // Predicated region
    $region2: #{tpu_custom_call.1} parent=1 // pred_check
      _
    $region3: #{tpu_custom_call.1} parent=1 // pred_check_branch
      %10 = sbr.rel (0) target = $region5
    $region4: #{tpu_custom_call.1} parent=1 // pred_region
      _
    $region5: #{tpu_custom_call.1} parent=1 // pred_fallthru
      _
    // Predicated region
    $region6: #{tpu_custom_call.1} parent=1 // pred_check
      _
    $region7: #{tpu_custom_call.1} parent=1 // pred_check_branch
      %12 = sbr.rel (0) target = $region9
    $region8: #{tpu_custom_call.1} parent=1 // pred_region
      // Predicated region
      $region10: #{tpu_custom_call.1} parent=8 // pred_check
        _
      $region11: #{tpu_custom_call.1} parent=8 // pred_check_branch
        %14 = sbr.rel (0) target = $region13
      $region12: #{tpu_custom_call.1} parent=8 // pred_region
        // Predicated region
        $region14: #{tpu_custom_call.1} parent=12 // pred_check
          _
        $region15: #{tpu_custom_call.1} parent=12 // pred_check_branch
          %16 = sbr.rel target = $region17
        $region16: #{tpu_custom_call.1} parent=12 // pred_region
          // Predicated region
          $region29: #{tpu_custom_call.1} parent=16 // pred_check
            _
          $region30: #{tpu_custom_call.1} parent=16 // pred_check_branch
            %38 = sbr.rel (0) target = $region32
          $region31: #{tpu_custom_call.1} parent=16 // pred_region
            loop: start=0, step=1, limit=1
            $region33: #{tpu_custom_call.1} parent=31 // loop_pre_header
              _
            $region34: #{tpu_custom_call.1} parent=31 // loop_header
              %s40 = sphi 0, %s44
              %p41 = scmp.ge.s32.totalorder %s40, 1
              %s45 = sphi %s1, %s1
              %s46 = sphi [#allocation2], [#allocation2]
            $region35: #{tpu_custom_call.1} parent=31 // loop_header_branch
              %43 = sbr.rel (%p41) target = $region39
            $region36: #{tpu_custom_call.1} parent=31 // loop_body
              _
            $region37: #{tpu_custom_call.1} parent=31 // loop_footer
              %s44 = sadd.s32 1, %s40
            $region38: #{tpu_custom_call.1} parent=31 // loop_footer_branch
              %39 = sbr.rel target = $region34
            $region39: #{tpu_custom_call.1} parent=31 // loop_exit
              _
            %s48 = ssub.s32 16, 1
            loop: start=0, step=1, limit=1
            $region40: #{tpu_custom_call.1} parent=31 // loop_pre_header
              _
            $region41: #{tpu_custom_call.1} parent=31 // loop_header
              %s50 = sphi 0, %s54
              %p51 = scmp.ge.s32.totalorder %s50, 1
              %s55 = sphi %s1, %s1
              %s56 = sphi [#allocation2], [#allocation2]
            $region42: #{tpu_custom_call.1} parent=31 // loop_header_branch
              %53 = sbr.rel (%p51) target = $region46
            $region43: #{tpu_custom_call.1} parent=31 // loop_body
              %v57 = vld [vmem:[%s55] sm:%s48]
              %58 = vst [vmem:[%s56] sm:%s48] %v57
              %v59 = vld [vmem:[%s55 + $0x4] sm:%s48]
              %60 = vst [vmem:[%s56 + $0x8] sm:%s48] %v59
              %v61 = vld [vmem:[%s55 + $0x8] sm:%s48]
              %62 = vst [vmem:[%s56 + $0x10] sm:%s48] %v61
              %v63 = vld [vmem:[%s55 + $0xc] sm:%s48]
              %64 = vst [vmem:[%s56 + $0x18] sm:%s48] %v63
            $region44: #{tpu_custom_call.1} parent=31 // loop_footer
              %s54 = sadd.s32 1, %s50
            $region45: #{tpu_custom_call.1} parent=31 // loop_footer_branch
              %49 = sbr.rel target = $region41
            $region46: #{tpu_custom_call.1} parent=31 // loop_exit
              _
          $region32: #{tpu_custom_call.1} parent=16 // pred_fallthru
            _
        $region17: #{tpu_custom_call.1} parent=12 // pred_fallthru
          _
        // Predicated region
        $region18: #{tpu_custom_call.1} parent=12 // pred_check
          _
        $region19: #{tpu_custom_call.1} parent=12 // pred_check_branch
          %18 = sbr.rel (0) target = $region21
        $region20: #{tpu_custom_call.1} parent=12 // pred_region
          %s20 = ssub.s32 16, 1
          loop: start=0, step=1, limit=1
          $region22: #{tpu_custom_call.1} parent=20 // loop_pre_header
            _
          $region23: #{tpu_custom_call.1} parent=20 // loop_header
            %s22 = sphi 0, %s26
            %p23 = scmp.ge.s32.totalorder %s22, 1
            %s27 = sphi %s1, %s1
            %s28 = sphi [#allocation2], [#allocation2]
          $region24: #{tpu_custom_call.1} parent=20 // loop_header_branch
            %25 = sbr.rel (%p23) target = $region28
          $region25: #{tpu_custom_call.1} parent=20 // loop_body
            %v29 = vld [vmem:[%s27] sm:%s20]
            %30 = vst [vmem:[%s28] sm:%s20] %v29
            %v31 = vld [vmem:[%s27 + $0x4] sm:%s20]
            %32 = vst [vmem:[%s28 + $0x8] sm:%s20] %v31
            %v33 = vld [vmem:[%s27 + $0x8] sm:%s20]
            %34 = vst [vmem:[%s28 + $0x10] sm:%s20] %v33
            %v35 = vld [vmem:[%s27 + $0xc] sm:%s20]
            %36 = vst [vmem:[%s28 + $0x18] sm:%s20] %v35
          $region26: #{tpu_custom_call.1} parent=20 // loop_footer
            %s26 = sadd.s32 1, %s22
          $region27: #{tpu_custom_call.1} parent=20 // loop_footer_branch
            %21 = sbr.rel target = $region23
          $region28: #{tpu_custom_call.1} parent=20 // loop_exit
            _
        $region21: #{tpu_custom_call.1} parent=12 // pred_fallthru
          _
      $region13: #{tpu_custom_call.1} parent=8 // pred_fallthru
        _
      %65 = vnop
    $region9: #{tpu_custom_call.1} parent=1 // pred_fallthru
      _
    // Predicated region
    $region47: #{tpu_custom_call.1} parent=1 // pred_check
      _
    $region48: #{tpu_custom_call.1} parent=1 // pred_check_branch
      %67 = sbr.rel (0) target = $region50
    $region49: #{tpu_custom_call.1} parent=1 // pred_region
      _
    $region50: #{tpu_custom_call.1} parent=1 // pred_fallthru
      _
    // Predicated region
    $region51: #{tpu_custom_call.1} parent=1 // pred_check
      _
    $region52: #{tpu_custom_call.1} parent=1 // pred_check_branch
      %69 = sbr.rel (0) target = $region54
    $region53: #{tpu_custom_call.1} parent=1 // pred_region
      _
    $region54: #{tpu_custom_call.1} parent=1 // pred_fallthru
      _
    %v71 = vld [vmem:[%s0] sm:$0xff]
    %v72 = vld [vmem:[%s0 + $0x8] sm:$0xff]
    %v73 = vld [vmem:[#allocation2] sm:$0xff]
    %v74 = vld [vmem:[#allocation2 + $0x8] sm:$0xff]
    %v75 = vld [vmem:[#allocation2 + $0x10] sm:$0xff]
    %v76 = vld [vmem:[#allocation2 + $0x18] sm:$0xff]
    %v77 = vld [vmem:[#allocation2 + $0x20] sm:$0xff]
    %v78 = vld [vmem:[#allocation2 + $0x28] sm:$0xff]
    %v79 = vld [vmem:[#allocation2 + $0x30] sm:$0xff]
    %v80 = vld [vmem:[#allocation2 + $0x38] sm:$0xff]
    %v81 = vld [vmem:[#allocation2 + $0x40] sm:$0xff]
    %v82 = vld [vmem:[#allocation2 + $0x48] sm:$0xff]
    %v83 = vld [vmem:[#allocation2 + $0x50] sm:$0xff]
    %v84 = vld [vmem:[#allocation2 + $0x58] sm:$0xff]
    %v85 = vld [vmem:[#allocation2 + $0x60] sm:$0xff]
    %v86 = vld [vmem:[#allocation2 + $0x68] sm:$0xff]
    %v87 = vld [vmem:[#allocation2 + $0x70] sm:$0xff]
    %v88 = vld [vmem:[#allocation2 + $0x78] sm:$0xff]
    %v89 = vlaneseq
    %v90 = vand.u32 %v89, 127
    %vm91 = vcmp.lt.s32.totalorder %v90, 32
    %v92 = vlaneseq
    %v93 = vshrl.u32 %v92, 7
    %v94 = vadd.s32 %v93, 8
    %v95 = vadd.s32 %v93, 16
    %v96 = vadd.s32 %v93, 24
    %v97 = vadd.s32 %v93, 32
    %v98 = vadd.s32 %v93, 40
    %v99 = vadd.s32 %v93, 48
    %v100 = vadd.s32 %v93, 56
    %v101 = vadd.s32 %v93, 64
    %v102 = vadd.s32 %v93, 72
    %v103 = vadd.s32 %v93, 80
    %v104 = vadd.s32 %v93, 88
    %v105 = vadd.s32 %v93, 96
    %v106 = vadd.s32 %v93, 104
    %v107 = vadd.s32 %v93, 112
    %v108 = vadd.s32 %v93, 120
    %vm109 = vcmp.lt.s32.totalorder %v93, 32
    %vm110 = vcmp.lt.s32.totalorder %v94, 32
    %vm111 = vcmp.lt.s32.totalorder %v95, 32
    %vm112 = vcmp.lt.s32.totalorder %v96, 32
    %vm113 = vcmp.lt.s32.totalorder %v97, 32
    %vm114 = vcmp.lt.s32.totalorder %v98, 32
    %vm115 = vcmp.lt.s32.totalorder %v99, 32
    %vm116 = vcmp.lt.s32.totalorder %v100, 32
    %vm117 = vcmp.lt.s32.totalorder %v101, 32
    %vm118 = vcmp.lt.s32.totalorder %v102, 32
    %vm119 = vcmp.lt.s32.totalorder %v103, 32
    %vm120 = vcmp.lt.s32.totalorder %v104, 32
    %vm121 = vcmp.lt.s32.totalorder %v105, 32
    %vm122 = vcmp.lt.s32.totalorder %v106, 32
    %vm123 = vcmp.lt.s32.totalorder %v107, 32
    %vm124 = vcmp.lt.s32.totalorder %v108, 32
    %v125 = vsel %vm91, 1, 0
    %vm126 = vcmp.eq.s32.totalorder %v125, 1
    %v127 = vsel %vm126, %v71, 0.0
    %v128 = vsel %vm126, %v72, 0.0
    %v129 = vsel %vm109, 1, 0
    %v130 = vsel %vm110, 1, 0
    %v131 = vsel %vm111, 1, 0
    %v132 = vsel %vm112, 1, 0
    %v133 = vsel %vm113, 1, 0
    %v134 = vsel %vm114, 1, 0
    %v135 = vsel %vm115, 1, 0
    %v136 = vsel %vm116, 1, 0
    %v137 = vsel %vm117, 1, 0
    %v138 = vsel %vm118, 1, 0
    %v139 = vsel %vm119, 1, 0
    %v140 = vsel %vm120, 1, 0
    %v141 = vsel %vm121, 1, 0
    %v142 = vsel %vm122, 1, 0
    %v143 = vsel %vm123, 1, 0
    %v144 = vsel %vm124, 1, 0
    %vm145 = vcmp.eq.s32.totalorder %v129, 1
    %vm146 = vcmp.eq.s32.totalorder %v130, 1
    %vm147 = vcmp.eq.s32.totalorder %v131, 1
    %vm148 = vcmp.eq.s32.totalorder %v132, 1
    %vm149 = vcmp.eq.s32.totalorder %v133, 1
    %vm150 = vcmp.eq.s32.totalorder %v134, 1
    %vm151 = vcmp.eq.s32.totalorder %v135, 1
    %vm152 = vcmp.eq.s32.totalorder %v136, 1
    %vm153 = vcmp.eq.s32.totalorder %v137, 1
    %vm154 = vcmp.eq.s32.totalorder %v138, 1
    %vm155 = vcmp.eq.s32.totalorder %v139, 1
    %vm156 = vcmp.eq.s32.totalorder %v140, 1
    %vm157 = vcmp.eq.s32.totalorder %v141, 1
    %vm158 = vcmp.eq.s32.totalorder %v142, 1
    %vm159 = vcmp.eq.s32.totalorder %v143, 1
    %vm160 = vcmp.eq.s32.totalorder %v144, 1
    %vm161 = vmpackc.low %vm145, %vm145
    %vm162 = vmpackc.low %vm146, %vm146
    %vm163 = vmpackc.low %vm147, %vm147
    %vm164 = vmpackc.low %vm148, %vm148
    %vm165 = vmpackc.low %vm149, %vm149
    %vm166 = vmpackc.low %vm150, %vm150
    %vm167 = vmpackc.low %vm151, %vm151
    %vm168 = vmpackc.low %vm152, %vm152
    %vm169 = vmpackc.low %vm153, %vm153
    %vm170 = vmpackc.low %vm154, %vm154
    %vm171 = vmpackc.low %vm155, %vm155
    %vm172 = vmpackc.low %vm156, %vm156
    %vm173 = vmpackc.low %vm157, %vm157
    %vm174 = vmpackc.low %vm158, %vm158
    %vm175 = vmpackc.low %vm159, %vm159
    %vm176 = vmpackc.low %vm160, %vm160
    %v177 = vsel %vm161, %v73, 0
    %v178 = vsel %vm162, %v74, 0
    %v179 = vsel %vm163, %v75, 0
    %v180 = vsel %vm164, %v76, 0
    %v181 = vsel %vm165, %v77, 0
    %v182 = vsel %vm166, %v78, 0
    %v183 = vsel %vm167, %v79, 0
    %v184 = vsel %vm168, %v80, 0
    %v185 = vsel %vm169, %v81, 0
    %v186 = vsel %vm170, %v82, 0
    %v187 = vsel %vm171, %v83, 0
    %v188 = vsel %vm172, %v84, 0
    %v189 = vsel %vm173, %v85, 0
    %v190 = vsel %vm174, %v86, 0
    %v191 = vsel %vm175, %v87, 0
    %v192 = vsel %vm176, %v88, 0
    %v193 = vpack.c.bf16 %v128, %v127
    %v194 = vld [vmem:[%s2] sm:$0x3]
    %v196 = vperm.slane %v194, 0
    %v197 = vperm.slane %v194, 1
    %v216 = vunpack.c.l.b16 %v177
    %v217 = vunpack.c.h.b16 %v177
    %v218 = vunpack.c.l.b16 %v178
    %v219 = vunpack.c.h.b16 %v178
    %v220 = vunpack.c.l.b16 %v179
    %v221 = vunpack.c.h.b16 %v179
    %v222 = vunpack.c.l.b16 %v180
    %v223 = vunpack.c.h.b16 %v180
    %v224 = vunpack.c.l.b16 %v181
    %v225 = vunpack.c.h.b16 %v181
    %v226 = vunpack.c.l.b16 %v182
    %v227 = vunpack.c.h.b16 %v182
    %v228 = vunpack.c.l.b16 %v183
    %v229 = vunpack.c.h.b16 %v183
    %v230 = vunpack.c.l.b16 %v184
    %v231 = vunpack.c.h.b16 %v184
    %v232 = vunpack.c.l.b16 %v185
    %v233 = vunpack.c.h.b16 %v185
    %v234 = vunpack.c.l.b16 %v186
    %v235 = vunpack.c.h.b16 %v186
    %v236 = vunpack.c.l.b16 %v187
    %v237 = vunpack.c.h.b16 %v187
    %v238 = vunpack.c.l.b16 %v188
    %v239 = vunpack.c.h.b16 %v188
    %v240 = vunpack.c.l.b16 %v189
    %v241 = vunpack.c.h.b16 %v189
    %v242 = vunpack.c.l.b16 %v190
    %v243 = vunpack.c.h.b16 %v190
    %v244 = vunpack.c.l.b16 %v191
    %v245 = vunpack.c.h.b16 %v191
    %v246 = vunpack.c.l.b16 %v192
    %v247 = vunpack.c.h.b16 %v192
    %v248 = vpack.c.b16 %v218, %v216
    %v249 = vpack.c.b16 %v219, %v217
    %v250 = vpack.c.b16 %v222, %v220
    %v251 = vpack.c.b16 %v223, %v221
    %v252 = vpack.c.b16 %v226, %v224
    %v253 = vpack.c.b16 %v227, %v225
    %v254 = vpack.c.b16 %v230, %v228
    %v255 = vpack.c.b16 %v231, %v229
    %v256 = vpack.c.b16 %v234, %v232
    %v257 = vpack.c.b16 %v235, %v233
    %v258 = vpack.c.b16 %v238, %v236
    %v259 = vpack.c.b16 %v239, %v237
    %v260 = vpack.c.b16 %v242, %v240
    %v261 = vpack.c.b16 %v243, %v241
    %v262 = vpack.c.b16 %v246, %v244
    %v263 = vpack.c.b16 %v247, %v245
    %280 = vmatpush.bf16.msra.mxu0 %v262
    %281 = vmatpush.bf16.msra.mxu0 %v260
    %282 = vmatpush.bf16.msra.mxu0 %v258
    %283 = vmatpush.bf16.msra.mxu0 %v256
    %284 = vmatpush.bf16.msra.mxu0 %v254
    %285 = vmatpush.bf16.msra.mxu0 %v252
    %286 = vmatpush.bf16.msra.mxu0 %v250
    %287 = vmatpush.bf16.msra.mxu0 %v248
    %288 = vmatmul.bf16.gmra.mxu0 %v193
    %v289 = vpop.f32.mrf.mxu0
    %v290 = vadd.f32 %v196, %v289
    %v291 = vpop.f32.mrf.mxu0
    %v292 = vadd.f32 %v196, %v291
    %293 = vdwg.mxu0
    %294 = vmatpush.bf16.msra.mxu0 %v263
    %295 = vmatpush.bf16.msra.mxu0 %v261
    %296 = vmatpush.bf16.msra.mxu0 %v259
    %297 = vmatpush.bf16.msra.mxu0 %v257
    %298 = vmatpush.bf16.msra.mxu0 %v255
    %299 = vmatpush.bf16.msra.mxu0 %v253
    %300 = vmatpush.bf16.msra.mxu0 %v251
    %301 = vmatpush.bf16.msra.mxu0 %v249
    %302 = vmatmul.bf16.gmra.mxu0 %v193
    %v303 = vpop.f32.mrf.mxu0
    %v304 = vadd.f32 %v197, %v303
    %v305 = vpop.f32.mrf.mxu0
    %v306 = vadd.f32 %v197, %v305
    %307 = vdwg.mxu0
    %308 = vst [vmem:[#allocation3] sm:$0xff] %v290
    %309 = vst [vmem:[#allocation3 + $0x8] sm:$0xff] %v304
    %310 = vst [vmem:[#allocation3 + $0x10] sm:$0xff] %v292
    %311 = vst [vmem:[#allocation3 + $0x18] sm:$0xff] %v306
    // Predicated region
    $region55: #{tpu_custom_call.1} parent=1 // pred_check
      _
    $region56: #{tpu_custom_call.1} parent=1 // pred_check_branch
      %313 = sbr.rel (0) target = $region58
    $region57: #{tpu_custom_call.1} parent=1 // pred_region
      %315 = vsyncadd [#allocation4], 256
      %s316 = sshll.u32 [#allocation3], 4
      %s317 = int_to_ptr.vmem [resolvable:$true] %s316
      %s318 = sshll.u32 %s3, 4
      %s319 = int_to_ptr.hbm [resolvable:$true] %s318
      %324 = dma.vmem_to_hbm [thread:$0]  %s317, 256, %s319, [#allocation4], 256, 128, 8
    $region58: #{tpu_custom_call.1} parent=1 // pred_fallthru
      _
    // Predicated region
    $region59: #{tpu_custom_call.1} parent=1 // pred_check
      _
    $region60: #{tpu_custom_call.1} parent=1 // pred_check_branch
      %326 = sbr.rel (0) target = $region62
    $region61: #{tpu_custom_call.1} parent=1 // pred_region
      %328 = dma.done [#allocation4], 512
    $region62: #{tpu_custom_call.1} parent=1 // pred_fallthru
      _
    %329 = vsyncpa [#allocation4], 1

</llo_original>
